<compile_context>
chip_gen: v7x
topology: tpu7x:2x2x1
jax: 0.10.0
libtpu: 0.0.40
codegen_flags: <defaults>
</compile_context>

<pallas_src>
import jax
import jax.numpy as jnp
from jax.experimental import pallas as pl
from jax.experimental.pallas import tpu as pltpu

IN_FEATURES = 45
NUM_TARGETS = 3      # stand-in for len(targets) (undefined in the original module)
LANE = 128           # MXU/VPU lane width used for the in-register padded accumulate


def _round_up(n, m):
    return ((n + m - 1) // m) * m


def _linear_kernel(x_ref, w_ref, b_ref, o_ref):
    # x_ref: (TM, F)    one batch tile (tail tile may contain garbage OOB rows)
    # w_ref: (F, LANE)  pre-transposed, zero-padded weight; resident in VMEM
    # b_ref: (1, C)     bias; resident in VMEM
    # o_ref: (TM, C)    narrow output block; Pallas masks writes for the partial tile
    c = o_ref.shape[1]
    acc = jnp.dot(x_ref[...], w_ref[...], preferred_element_type=jnp.float32)  # (TM, LANE)
    o_ref[...] = (acc[:, :c] + b_ref[...]).astype(o_ref.dtype)


def svm_forward(x, weight, bias, *, tm=4096, xla_fallback_rows=16):
    """Linear layer: x (B, F) float, weight (C, F) torch-Linear layout, bias (C,).
    Returns (B, C)."""
    B, F = x.shape
    C, F2 = weight.shape
    assert F == F2 and bias.shape == (C,)
    assert C <= LANE, "in-register pad width assumes C <= 128"

    # Tiny batch: one grid step of DMA is smaller than pallas_call dispatch overhead.
    if B < xla_fallback_rows:
        return x @ weight.T + bias

    # One-time wrapper-side prep: (K, N) layout for the MXU, output channels zero-
    # padded to a full 128 lanes.  Padded lanes never reach HBM (kernel stores [:C]).
    w_pad = jnp.zeros((F, LANE), weight.dtype).at[:, :C].set(weight.T)
    b2 = bias.reshape(1, C)

    # Batch tiling: tiles as big as possible (amortize fixed per-step cost) but at
    # least 2 so the "parallel" grid axis can use both TensorCores on v7x.  No batch
    # padding copy: the partial last block is handled by Pallas (masked writeback).
    TM = min(tm, max(8, _round_up(pl.cdiv(B, 2), 8)))
    n_tiles = pl.cdiv(B, TM)

    out_dtype = x.dtype
    cost = pl.CostEstimate(
        flops=2 * B * F * C,
        transcendentals=0,
        bytes_accessed=(
            x.size * x.dtype.itemsize
            + w_pad.size * w_pad.dtype.itemsize
            + b2.size * b2.dtype.itemsize
            + B * C * jnp.dtype(out_dtype).itemsize
        ),
    )

    return pl.pallas_call(
        _linear_kernel,
        out_shape=jax.ShapeDtypeStruct((B, C), out_dtype),
        grid_spec=pltpu.PrefetchScalarGridSpec(
            num_scalar_prefetch=0,
            grid=(n_tiles,),
            in_specs=[
                # x: one batch tile per grid step
                pl.BlockSpec((TM, F), lambda i: (i, 0)),
                # weight / bias: constant block index -> resident in VMEM across tiles
                pl.BlockSpec((F, LANE), lambda i: (0, 0)),
                pl.BlockSpec((1, C), lambda i: (0, 0)),
            ],
            # narrow (unpadded) output block: HBM writeback is C lanes, not 128
            out_specs=pl.BlockSpec((TM, C), lambda i: (i, 0)),
        ),
        compiler_params=pltpu.CompilerParams(
            dimension_semantics=("parallel",),  # shard batch tiles across v7x's 2 TCs
        ),
        cost_estimate=cost,
    )(x, w_pad, b2)


def _ref_forward(x, weight, bias):
    return x @ weight.T + bias


if __name__ == "__main__":
    key = jax.random.PRNGKey(0)
    kx, kw, kb, kx2 = jax.random.split(key, 4)

    # Deterministic params, mimicking nn.Linear's uniform(-1/sqrt(F), 1/sqrt(F)) init.
    bound = 1.0 / (IN_FEATURES ** 0.5)
    weight = jax.random.uniform(
        kw, (NUM_TARGETS, IN_FEATURES), dtype=jnp.float32, minval=-bound, maxval=bound
    )
    bias = jax.random.uniform(
        kb, (NUM_TARGETS,), dtype=jnp.float32, minval=-bound, maxval=bound
    )

    # 1) Tiny batch: XLA fallback path AND forced single-tile Pallas path.
    B = 8
    x = jax.random.normal(kx, (B, IN_FEATURES), dtype=jnp.float32)
    ref = _ref_forward(x, weight, bias)
    out_fb = jax.block_until_ready(svm_forward(x, weight, bias))                       # fallback
    out_pl = jax.block_until_ready(svm_forward(x, weight, bias, xla_fallback_rows=0))  # Pallas
    assert out_fb.shape == (B, NUM_TARGETS) and out_pl.shape == (B, NUM_TARGETS)
    assert jnp.allclose(out_fb, ref, atol=1e-5, rtol=1e-5)
    assert jnp.allclose(out_pl, ref, atol=1e-5, rtol=1e-5)

    # 2) Multi-tile Pallas path with a partial (masked) last block, no padding copy.
    B2 = 200
    x2 = jax.random.normal(kx2, (B2, IN_FEATURES), dtype=jnp.float32)
    out2 = jax.block_until_ready(svm_forward(x2, weight, bias, tm=64))
    ref2 = _ref_forward(x2, weight, bias)
    assert out2.shape == (B2, NUM_TARGETS)
    assert jnp.allclose(out2, ref2, atol=1e-5, rtol=1e-5)

    print("KERNEL_OK")
</pallas_src>

<mosaic_0001>
module attributes {stable_mosaic.version = 11 : i64} {
  func.func @_linear_kernel(%arg0: i32, %arg1: memref<8x45xf32, #tpu.memory_space<vmem>>, %arg2: memref<45x128xf32, #tpu.memory_space<vmem>>, %arg3: memref<1x3xf32, #tpu.memory_space<vmem>>, %arg4: memref<8x3xf32, #tpu.memory_space<vmem>>) attributes {dimension_semantics = [#tpu.dimension_semantics<parallel>], iteration_bounds = array<i64: 1>, scalar_prefetch = 0 : i64, scratch_operands = 0 : i64, tpu.core_type = #tpu.core_type<tc>, window_params = [{transform_indices = @transform_0, window_bounds = array<i64: 8, 45>}, {pipeline_mode = #tpu.pipeline_mode<synchronous>, transform_indices = @transform_1, window_bounds = array<i64: 45, 128>}, {pipeline_mode = #tpu.pipeline_mode<synchronous>, transform_indices = @transform_2, window_bounds = array<i64: 1, 3>}, {transform_indices = @transform_3, window_bounds = array<i64: 8, 3>}]} {
    %c0 = arith.constant 0 : index
    %c0_0 = arith.constant 0 : index
    %0 = vector.load %arg1[%c0, %c0_0] : memref<8x45xf32, #tpu.memory_space<vmem>>, vector<8x45xf32>
    %c0_1 = arith.constant 0 : index
    %c0_2 = arith.constant 0 : index
    %1 = vector.load %arg2[%c0_1, %c0_2] : memref<45x128xf32, #tpu.memory_space<vmem>>, vector<45x128xf32>
    %cst = arith.constant dense<0.000000e+00> : vector<8x128xf32>
    %2 = tpu.matmul %0, %1, %cst {dimension_numbers = #tpu.dot_dimension_numbers<[1], [0], [0], [1], [0, 0, 1, 1], [], []>} : vector<8x45xf32>, vector<45x128xf32>, vector<8x128xf32> -> vector<8x128xf32>
    %3 = vector.extract_strided_slice %2 {offsets = [0, 0], sizes = [8, 3], strides = [1, 1]} : vector<8x128xf32> to vector<8x3xf32>
    %c0_3 = arith.constant 0 : index
    %c0_4 = arith.constant 0 : index
    %4 = vector.load %arg3[%c0_3, %c0_4] : memref<1x3xf32, #tpu.memory_space<vmem>>, vector<1x3xf32>
    %5 = vector.broadcast %4 : vector<1x3xf32> to vector<8x3xf32>
    %6 = arith.addf %3, %5 : vector<8x3xf32>
    %c0_5 = arith.constant 0 : index
    %c0_6 = arith.constant 0 : index
    %7 = vector.load %arg4[%c0_5, %c0_6] : memref<8x3xf32, #tpu.memory_space<vmem>>, vector<8x3xf32>
    tpu.vector_store %arg4[%c0_5, %c0_6], %6 {strides = array<i32>} : memref<8x3xf32, #tpu.memory_space<vmem>>, vector<8x3xf32>,
    return
  }
  func.func @transform_0(%arg0: i32) -> (i32, i32) {
    %c0_i32 = arith.constant 0 : i32
    %c0_i32_0 = arith.constant 0 : i32
    return %arg0, %c0_i32 : i32, i32
  }
  func.func @transform_1(%arg0: i32) -> (i32, i32) {
    %c0_i32 = arith.constant 0 : i32
    %c0_i32_0 = arith.constant 0 : i32
    %c0_i32_1 = arith.constant 0 : i32
    return %c0_i32, %c0_i32_0 : i32, i32
  }
  func.func @transform_2(%arg0: i32) -> (i32, i32) {
    %c0_i32 = arith.constant 0 : i32
    %c0_i32_0 = arith.constant 0 : i32
    %c0_i32_1 = arith.constant 0 : i32
    return %c0_i32, %c0_i32_0 : i32, i32
  }
  func.func @transform_3(%arg0: i32) -> (i32, i32) {
    %c0_i32 = arith.constant 0 : i32
    %c0_i32_0 = arith.constant 0 : i32
    return %arg0, %c0_i32 : i32, i32
  }
}

</mosaic_0001>

<llo_original>
// kernel: tpu_custom_call.1
$region0: #{tpu_custom_call.1}
  #allocation0 [shape = 'u32[]', space=smem, size = 0x4, offset = 0x4, fixed_abs, tag = 'smem constant byte address 0x4 - core index']
  #allocation1 [shape = 'u32[144,128]{1,0:T(1,128)}', space=vmem, size = 0x12000, scoped, tag = 'internal scratch']
  %s0 = inlined_call_operand.hbm [shape: f32[8,45], index: 0, kind: input, shape index: {}]
  %s1 = inlined_call_operand.hbm [shape: f32[45,128], index: 1, kind: input, shape index: {}]
  %s2 = inlined_call_operand.vmem [shape: f32[1,3], index: 2, kind: input, shape index: {}]
  %s3 = inlined_call_operand.vmem [shape: f32[8,3], index: 3, kind: output, shape index: {}]
  %s4 = sld [smem:[#allocation0]]
  $region30: #{tpu_custom_call.1} parent=0
    _
  %s6 = ssub.s32 1, %s4
  %s7 = scalar_select 0, %s6, %s4
  $region1: #{tpu_custom_call.1} parent=0
    #allocation2 [shape = 'u8[4096]{0}', space=vmem, size = 0x1000, scoped, tag = 'input window, operand 0, single buffered']
    #allocation3 [shape = 's32[1]{0}', space=sflag, size = 0x4, scoped, tag = 'scoped memory for tpu_custom_call.1']
    #allocation4 [shape = 'u8[24576]{0}', space=vmem, size = 0x6000, scoped, tag = 'input window, operand 1, single buffered']
    #allocation5 [shape = 's32[1]{0}', space=sflag, size = 0x4, scoped, tag = 'scoped memory for tpu_custom_call.1']
    %8 = vsyncpa [#allocation3], 0
    %9 = vsyncpa [#allocation5], 0
    // Predicated region
    $region2: #{tpu_custom_call.1} parent=1 // pred_check
      _
    $region3: #{tpu_custom_call.1} parent=1 // pred_check_branch
      %11 = sbr.rel (0) target = $region5
    $region4: #{tpu_custom_call.1} parent=1 // pred_region
      %s13 = ssub.s32 128, 128
      %14 = vsyncadd [#allocation3], %s13
      %s16 = sshll.u32 [#allocation2], 4
      %s17 = int_to_ptr.vmem [resolvable:$true] %s16
      %19 = dma.hbm_to_vmem [thread:$0]  %s0, 128, %s17, [#allocation3]
    $region5: #{tpu_custom_call.1} parent=1 // pred_fallthru
      _
    // Predicated region
    $region6: #{tpu_custom_call.1} parent=1 // pred_check
      _
    $region7: #{tpu_custom_call.1} parent=1 // pred_check_branch
      %21 = sbr.rel (0) target = $region9
    $region8: #{tpu_custom_call.1} parent=1 // pred_region
      %s23 = ssub.s32 768, 768
      %24 = vsyncadd [#allocation5], %s23
      %s25 = sshll.u32 [#allocation4], 4
      %s26 = int_to_ptr.vmem [resolvable:$true] %s25
      %31 = dma.hbm_to_vmem [thread:$0]  %s1, 768, %s26, [#allocation5], 128, 128, 8
    $region9: #{tpu_custom_call.1} parent=1 // pred_fallthru
      _
    // Predicated region
    $region10: #{tpu_custom_call.1} parent=1 // pred_check
      _
    $region11: #{tpu_custom_call.1} parent=1 // pred_check_branch
      %33 = sbr.rel (0) target = $region13
    $region12: #{tpu_custom_call.1} parent=1 // pred_region
      _
    $region13: #{tpu_custom_call.1} parent=1 // pred_fallthru
      _
    // Predicated region
    $region14: #{tpu_custom_call.1} parent=1 // pred_check
      _
    $region15: #{tpu_custom_call.1} parent=1 // pred_check_branch
      %35 = sbr.rel (0) target = $region17
    $region16: #{tpu_custom_call.1} parent=1 // pred_region
      %36 = dma.done [#allocation3], 128
    $region17: #{tpu_custom_call.1} parent=1 // pred_fallthru
      _
    // Predicated region
    $region18: #{tpu_custom_call.1} parent=1 // pred_check
      _
    $region19: #{tpu_custom_call.1} parent=1 // pred_check_branch
      %38 = sbr.rel (0) target = $region21
    $region20: #{tpu_custom_call.1} parent=1 // pred_region
      %39 = dma.done [#allocation5], 768
    $region21: #{tpu_custom_call.1} parent=1 // pred_fallthru
      _
    %v40 = vld [vmem:[#allocation2] sm:$0xff]
    %v41 = vld [vmem:[#allocation4] sm:$0xff]
    %v42 = vld [vmem:[#allocation4 + $0x8] sm:$0xff]
    %v43 = vld [vmem:[#allocation4 + $0x10] sm:$0xff]
    %v44 = vld [vmem:[#allocation4 + $0x18] sm:$0xff]
    %v45 = vld [vmem:[#allocation4 + $0x20] sm:$0xff]
    %v46 = vld [vmem:[#allocation4 + $0x28] sm:$0x1f]
    %vm47 = vcmask 367616
    %v49 = vsel %vm47, %v40, 0
    %vm51 = vcmask 1044480
    %v53 = vsel %vm51, %v46, 0
    %55 = vmatprep.subr.mxu0 0.0
    %56 = vmatpush1.msra.mxu0 %v41
    %57 = vmatprep.subr.mxu0 0.0
    %58 = vmatpush1.msra.mxu0 %v42
    %59 = vmatprep.subr.mxu0 0.0
    %60 = vmatpush1.msra.mxu0 %v43
    %61 = vmatprep.subr.mxu0 0.0
    %62 = vmatpush1.msra.mxu0 %v44
    %63 = vmatprep.subr.mxu0 0.0
    %64 = vmatpush1.msra.mxu0 %v45
    %65 = vmatprep.subr.mxu0 0.0
    %66 = vmatpush1.msra.mxu0 %v53
    %67 = vmatprep.subr.mxu0 0.0
    %68 = vmatpush1.msra.mxu0 0.0
    %69 = vmatprep.subr.mxu0 0.0
    %70 = vmatpush1.msra.mxu0 0.0
    %71 = vmatprep.subr.mxu0 0.0
    %72 = vmatpush1.msra.mxu0 0.0
    %73 = vmatprep.subr.mxu0 0.0
    %74 = vmatpush1.msra.mxu0 0.0
    %75 = vmatprep.subr.mxu0 0.0
    %76 = vmatpush1.msra.mxu0 0.0
    %77 = vmatprep.subr.mxu0 0.0
    %78 = vmatpush1.msra.mxu0 0.0
    %79 = vmatprep.subr.mxu0 0.0
    %80 = vmatpush1.msra.mxu0 0.0
    %81 = vmatprep.subr.mxu0 0.0
    %82 = vmatpush1.msra.mxu0 0.0
    %83 = vmatprep.subr.mxu0 0.0
    %84 = vmatpush1.msra.mxu0 0.0
    %85 = vmatprep.subr.mxu0 0.0
    %86 = vmatpush1.msra.mxu0 0.0
    %87 = vmatprep.subr.mxu0 0.0
    %88 = vmatpush1.msra.mxu0 0.0
    %89 = vmatprep.subr.mxu0 0.0
    %90 = vmatpush1.msra.mxu0 0.0
    %91 = vmatprep.subr.mxu0 0.0
    %92 = vmatpush1.msra.mxu0 0.0
    %93 = vmatprep.subr.mxu0 0.0
    %94 = vmatpush1.msra.mxu0 0.0
    %95 = vmatprep.subr.mxu0 0.0
    %96 = vmatpush1.msra.mxu0 0.0
    %97 = vmatprep.subr.mxu0 0.0
    %98 = vmatpush1.msra.mxu0 0.0
    %99 = vmatprep.subr.mxu0 0.0
    %100 = vmatpush1.msra.mxu0 0.0
    %101 = vmatprep.subr.mxu0 0.0
    %102 = vmatpush1.msra.mxu0 0.0
    %103 = vmatprep.subr.mxu0 0.0
    %104 = vmatpush1.msra.mxu0 0.0
    %105 = vmatprep.subr.mxu0 0.0
    %106 = vmatpush1.msra.mxu0 0.0
    %107 = vmatprep.subr.mxu0 0.0
    %108 = vmatpush1.msra.mxu0 0.0
    %109 = vmatprep.subr.mxu0 0.0
    %110 = vmatpush1.msra.mxu0 0.0
    %111 = vmatprep.subr.mxu0 0.0
    %112 = vmatpush1.msra.mxu0 0.0
    %113 = vmatprep.subr.mxu0 0.0
    %114 = vmatpush1.msra.mxu0 0.0
    %115 = vmatprep.subr.mxu0 0.0
    %116 = vmatpush1.msra.mxu0 0.0
    %117 = vmatprep.subr.mxu0 0.0
    %118 = vmatpush1.msra.mxu0 0.0
    %119 = vmatprep.mubr.f32.mxu0 0.0
    %120 = vmatmul.mubr.f32.gmra.mrb[0].mxu0 %v49
    %v121 = vpop.f32.mrb[0].mxu0
    %v122 = vadd.f32 0.0, %v121
    %v123 = vpop.f32.mrb[0].mxu0
    %124 = vdwg.mxu0
    %v125 = vld [vmem:[%s2] sm:$0x1]
    %v127 = vlaneseq
    %v128 = vshrl.u32 %v127, 7
    %v129 = vsub.s32 0, %v128
    %v130 = vrot.slane %v125, %v129
    %v132 = vadd.f32 %v122, %v130
    %vm133 = vcmask 23552
    %134 = vst.msk [vmem:[%s3] sm:$0xff] %vm133, %v132
    // Predicated region
    $region22: #{tpu_custom_call.1} parent=1 // pred_check
      _
    $region23: #{tpu_custom_call.1} parent=1 // pred_check_branch
      %136 = sbr.rel (0) target = $region25
    $region24: #{tpu_custom_call.1} parent=1 // pred_region
      _
    $region25: #{tpu_custom_call.1} parent=1 // pred_fallthru
      _
    // Predicated region
    $region26: #{tpu_custom_call.1} parent=1 // pred_check
      _
    $region27: #{tpu_custom_call.1} parent=1 // pred_check_branch
      %138 = sbr.rel (0) target = $region29
    $region28: #{tpu_custom_call.1} parent=1 // pred_region
      _
    $region29: #{tpu_custom_call.1} parent=1 // pred_fallthru
      _
    %139 = vsyncpa [#allocation3], 1
    %140 = vsyncpa [#allocation5], 1

</llo_original>
